<compile_context>
chip_gen: v7x
topology: tpu7x:2x2x1
jax: 0.10.0
libtpu: 0.0.40
codegen_flags: <defaults>
</compile_context>

<pallas_src>
import numpy as np
import jax
import jax.numpy as jnp
from jax.experimental import pallas as pl
from jax.experimental.pallas import tpu as pltpu

ORDER = 3            # LMS order (matches LMSSampler default)
SIGMA_MIN = 0.02
SIGMA_MAX = 10.0
SIGMA_DATA = 0.5     # EDM preconditioning constant for the synthetic denoiser

NPREV = ORDER - 1    # previous-derivative ring slots kept in VMEM scratch
NCOL = 4 + NPREV     # per-step scalar-table width: [1/sigma, c_skip, c_out, c_new, c_slot0..]


# ----------------------------- host-side glue ------------------------------ #

def schedule_np(t):
    """Synthetic log-linear noise schedule sigma(t), t in [0, 1]."""
    t = np.asarray(t, np.float64)
    return np.exp((1.0 - t) * np.log(SIGMA_MIN) + t * np.log(SIGMA_MAX))


def adams_bashforth_np(t, i, order):
    """N-th order Adams-Bashforth coefficients (float64), oldest node first.

    Mirrors LMSSampler.adams_bashforth: Lagrange basis polynomials over the
    previous `order` nodes, integrated from t[i-1] to t[i] with Gauss-Legendre
    quadrature of n = order // 2 + 1 points.
    """
    t = np.asarray(t, np.float64)
    ti = t[i]
    tj = t[i - order:i]                                    # (order,)
    tt = np.concatenate([tj, tj])
    tk = np.stack([tt[k:k + order] for k in range(order + 1)])[:order, 1:]
    tj_tk = tj[:, None] - tk                               # (order, order-1)

    n = order // 2 + 1
    nodes, weights = np.polynomial.legendre.leggauss(n)
    a, b = tj[-1], ti
    x = 0.5 * (b - a) * nodes + 0.5 * (b + a)              # (n,)
    vals = np.prod((x[:, None, None] - tk[None]) / tj_tk[None], axis=-1)
    return 0.5 * (b - a) * np.sum(weights[:, None] * vals, axis=0)


def build_tables(w, b, steps):
    """Per-step scalar table, per-step (c_in-folded) weight table, bias, sigma(1)."""
    w64 = np.asarray(w, np.float64)
    C = w64.shape[0]
    R = 2 * C
    time = np.linspace(1.0, 0.0, steps + 1)
    ratio = schedule_np(time)                              # float64, descending sigmas
    sigma_1 = float(ratio[0])

    W2 = np.kron(w64, np.eye(2))                           # (2C, 2C) block form of 1x1 mix
    b2 = np.repeat(np.asarray(b, np.float32), 2).reshape(R, 1)

    scal = np.zeros((steps, NCOL), np.float32)
    wtab = np.zeros((steps, R, R), np.float32)
    for s in range(steps):
        sigma_s = float(ratio[s])
        K = min(s + 1, ORDER)
        coeffs = adams_bashforth_np(ratio, s + 1, order=K)          # (K,), oldest first

        c_skip = SIGMA_DATA ** 2 / (sigma_s ** 2 + SIGMA_DATA ** 2)
        c_out = sigma_s * SIGMA_DATA / np.sqrt(sigma_s ** 2 + SIGMA_DATA ** 2)
        c_in = 1.0 / np.sqrt(sigma_s ** 2 + SIGMA_DATA ** 2)

        scal[s, 0] = 1.0 / sigma_s                         # divide -> multiply in kernel
        scal[s, 1] = c_skip
        scal[s, 2] = c_out
        scal[s, 3] = coeffs[-1]                            # coefficient of the current z_s
        # z_{s-j} lives in ring slot (s - j) % NPREV; pair its coefficient with that slot.
        for j in range(1, K):
            scal[s, 4 + (s - j) % NPREV] = coeffs[K - 1 - j]
        wtab[s] = (c_in * W2).astype(np.float32)           # fold c_in into W
    return scal, wtab, b2, sigma_1


# ------------------------------ Pallas kernel ------------------------------ #

def lms_fused_kernel(scal_ref, x1_ref, w_ref, b_ref, o_ref, prev_ref):
    """Fully fused LMS sampler.  grid = (forecast, step).

    scal_ref : SMEM f32[steps, NCOL]  per-step scalars
    x1_ref   : VMEM f32[2C, Mr]       initial noise for this forecast
    w_ref    : VMEM f32[2C, 2C]       c_in-scaled kron(W, I2) for this step
    b_ref    : VMEM f32[2C, 1]        denoiser bias (constant)
    o_ref    : VMEM f32[2C, Mr]       resident state x_t; final value auto-written to HBM
    prev_ref : VMEM f32[NPREV, 2C, Mr] ring buffer of previous derivatives
    """
    s = pl.program_id(1)

    @pl.when(s == 0)
    def _init():
        o_ref[...] = x1_ref[...]
        prev_ref[...] = jnp.zeros_like(prev_ref)

    inv_sigma = scal_ref[s, 0]
    c_skip = scal_ref[s, 1]
    c_out = scal_ref[s, 2]
    c_new = scal_ref[s, 3]

    x = o_ref[...]                                          # (2C, Mr)

    # Synthetic denoiser: EDM-preconditioned 1x1 channel mix (c_in folded into W).
    h = jnp.dot(w_ref[...], x, preferred_element_type=jnp.float32)
    q = c_skip * x + c_out * jnp.tanh(h + b_ref[...])       # d(x_t) ~ E[x | x_t]

    # Derivative z_t = (x_t - d(x_t)) / sigma_t  (reciprocal precomputed on host).
    z = (x - q) * inv_sigma

    # Adams-Bashforth update: newest derivative + ring-buffer history.
    delta = c_new * z
    for r in range(NPREV):                                  # static unroll
        delta = delta + scal_ref[s, 4 + r] * prev_ref[r]
    o_ref[...] = x + delta

    # Store z_s into ring slot s % NPREV (overwrites the oldest derivative).
    for r in range(NPREV):
        @pl.when(s % NPREV == r)
        def _store(r=r):
            prev_ref[r] = z


@jax.jit
def lms_run(scal, x1, wtab, b2):
    F, R, Mr = x1.shape
    steps = scal.shape[0]
    return pl.pallas_call(
        lms_fused_kernel,
        out_shape=jax.ShapeDtypeStruct((F, R, Mr), jnp.float32),
        grid_spec=pltpu.PrefetchScalarGridSpec(
            num_scalar_prefetch=0,
            grid=(F, steps),
            in_specs=[
                pl.BlockSpec(memory_space=pltpu.MemorySpace.SMEM),        # scalar table
                pl.BlockSpec((None, R, Mr), lambda f, s: (f, 0, 0)),      # x1 (noise)
                pl.BlockSpec((None, R, R), lambda f, s: (s, 0, 0)),       # per-step W
                pl.BlockSpec((R, 1), lambda f, s: (0, 0)),                # bias (resident)
            ],
            out_specs=pl.BlockSpec((None, R, Mr), lambda f, s: (f, 0, 0)),
            scratch_shapes=[pltpu.VMEM((NPREV, R, Mr), jnp.float32)],     # derivative ring
        ),
        compiler_params=pltpu.CompilerParams(
            dimension_semantics=("parallel", "arbitrary")),
    )(scal, x1, wtab, b2)


# ------------------------------ sampler driver ----------------------------- #

def lms_sample(key, w, b, *, C, T, X, Y, forecast_size, steps):
    """Replicates LMSSampler.forward(trajectory_size=T, forecast_size, steps)."""
    M = T * X * Y
    R = 2 * C
    assert M % 2 == 0
    Mr = M // 2
    assert Mr % 128 == 0 and R % 8 == 0, "state layout must be lane/sublane aligned"

    scal, wtab, b2, sigma_1 = build_tables(w, b, steps)

    # x_1 ~ sigma(1) * N(0, I); all forecasts batched. (C, M) -> (2C, M/2) stacks the
    # two spatial halves of each channel on the sublane axis (exact row-major reshape).
    x1 = sigma_1 * jax.random.normal(key, (forecast_size, C, T, X, Y), jnp.float32)
    x1 = x1.reshape(forecast_size, R, Mr)

    out = lms_run(jnp.asarray(scal), x1, jnp.asarray(wtab), jnp.asarray(b2))
    return out.reshape(forecast_size, C, T, X, Y)


def lms_reference_np(scal, x1, wtab, b2):
    """Pure-numpy replica of the fused kernel math (for the self-check)."""
    x = np.asarray(x1, np.float32)                          # (F, R, Mr)
    prev = np.zeros((NPREV,) + x.shape, np.float32)
    for s in range(scal.shape[0]):
        inv_sigma, c_skip, c_out, c_new = scal[s, 0], scal[s, 1], scal[s, 2], scal[s, 3]
        h = np.einsum('rk,fkm->frm', wtab[s], x)
        q = c_skip * x + c_out * np.tanh(h + b2[None])
        z = (x - q) * inv_sigma
        delta = c_new * z
        for r in range(NPREV):
            delta = delta + scal[s, 4 + r] * prev[r]
        x = x + delta
        prev[s % NPREV] = z
    return x


if __name__ == "__main__":
    C, T, X, Y = 4, 8, 16, 16          # dimensions=(C, X, Y), trajectory_size=T
    forecast_size, steps = 2, 8

    key = jax.random.PRNGKey(0)
    kw, kb, ks = jax.random.split(key, 3)
    w = np.asarray(jax.random.normal(kw, (C, C), jnp.float32) * 0.5)   # synthetic denoiser
    b = np.asarray(jax.random.normal(kb, (C,), jnp.float32) * 0.1)

    out = lms_sample(ks, w, b, C=C, T=T, X=X, Y=Y,
                     forecast_size=forecast_size, steps=steps)
    out = jax.block_until_ready(out)

    assert out.shape == (forecast_size, C, T, X, Y), out.shape
    assert bool(jnp.all(jnp.isfinite(out)))

    # Loose numerical self-check against a pure-numpy replica of the same math.
    scal, wtab, b2, sigma_1 = build_tables(w, b, steps)
    x1 = sigma_1 * jax.random.normal(ks, (forecast_size, C, T, X, Y), jnp.float32)
    ref = lms_reference_np(scal, np.asarray(x1).reshape(forecast_size, 2 * C, -1), wtab, b2)
    ref = ref.reshape(forecast_size, C, T, X, Y)
    err = float(np.max(np.abs(np.asarray(out) - ref)))
    assert err < 1e-2 * (float(np.max(np.abs(ref))) + 1.0), f"mismatch: max abs err {err}"

    print("KERNEL_OK")
</pallas_src>

<mosaic_0001>
module attributes {stable_mosaic.version = 11 : i64} {
  func.func @lms_fused_kernel(%arg0: i32, %arg1: i32, %arg2: memref<8x6xf32, #tpu.memory_space<smem>>, %arg3: memref<1x8x1024xf32, #tpu.memory_space<vmem>>, %arg4: memref<1x8x8xf32, #tpu.memory_space<vmem>>, %arg5: memref<8x1xf32, #tpu.memory_space<vmem>>, %arg6: memref<1x8x1024xf32, #tpu.memory_space<vmem>>, %arg7: memref<2x8x1024xf32, #tpu.memory_space<vmem>>) attributes {dimension_semantics = [#tpu.dimension_semantics<parallel>, #tpu.dimension_semantics<arbitrary>], iteration_bounds = array<i64: 2, 8>, scalar_prefetch = 0 : i64, scratch_operands = 1 : i64, tpu.core_type = #tpu.core_type<tc>, window_params = [{transform_indices = @transform_0, window_bounds = array<i64: 8, 6>}, {transform_indices = @transform_1, window_bounds = array<i64: 1, 8, 1024>}, {transform_indices = @transform_2, window_bounds = array<i64: 1, 8, 8>}, {pipeline_mode = #tpu.pipeline_mode<synchronous>, transform_indices = @transform_3, window_bounds = array<i64: 8, 1>}, {transform_indices = @transform_4, window_bounds = array<i64: 1, 8, 1024>}]} {
    %c0_i32 = arith.constant 0 : i32
    %0 = arith.cmpi eq, %arg1, %c0_i32 : i32
    %1 = arith.extui %0 : i1 to i32
    %c0_i32_0 = arith.constant 0 : i32
    %2 = arith.cmpi ne, %1, %c0_i32_0 : i32
    scf.if %2 {
      %c0_32 = arith.constant 0 : index
      %c0_33 = arith.constant 0 : index
      %c0_34 = arith.constant 0 : index
      %74 = vector.load %arg3[%c0_32, %c0_33, %c0_34] : memref<1x8x1024xf32, #tpu.memory_space<vmem>>, vector<1x8x1024xf32>
      %75 = vector.shape_cast %74 : vector<1x8x1024xf32> to vector<8x1024xf32>
      %c0_35 = arith.constant 0 : index
      %c0_36 = arith.constant 0 : index
      %c0_37 = arith.constant 0 : index
      %76 = vector.load %arg6[%c0_35, %c0_36, %c0_37] : memref<1x8x1024xf32, #tpu.memory_space<vmem>>, vector<1x8x1024xf32>
      %77 = vector.shape_cast %76 : vector<1x8x1024xf32> to vector<8x1024xf32>
      %78 = vector.shape_cast %75 : vector<8x1024xf32> to vector<1x8x1024xf32>
      tpu.vector_store %arg6[%c0_35, %c0_36, %c0_37], %78 {strides = array<i32>} : memref<1x8x1024xf32, #tpu.memory_space<vmem>>, vector<1x8x1024xf32>,
      %cst_38 = arith.constant 0.000000e+00 : f32
      %79 = vector.broadcast %cst_38 : f32 to vector<2x8x1024xf32>
      %c0_39 = arith.constant 0 : index
      %c0_40 = arith.constant 0 : index
      %c0_41 = arith.constant 0 : index
      %80 = vector.load %arg7[%c0_39, %c0_40, %c0_41] : memref<2x8x1024xf32, #tpu.memory_space<vmem>>, vector<2x8x1024xf32>
      tpu.vector_store %arg7[%c0_39, %c0_40, %c0_41], %79 {strides = array<i32>} : memref<2x8x1024xf32, #tpu.memory_space<vmem>>, vector<2x8x1024xf32>,
    } else {
    }
    %3 = arith.index_cast %arg1 : i32 to index
    %c0 = arith.constant 0 : index
    %4 = memref.load %arg2[%3, %c0] : memref<8x6xf32, #tpu.memory_space<smem>>
    %5 = arith.index_cast %arg1 : i32 to index
    %c1 = arith.constant 1 : index
    %6 = memref.load %arg2[%5, %c1] : memref<8x6xf32, #tpu.memory_space<smem>>
    %7 = arith.index_cast %arg1 : i32 to index
    %c2 = arith.constant 2 : index
    %8 = memref.load %arg2[%7, %c2] : memref<8x6xf32, #tpu.memory_space<smem>>
    %9 = arith.index_cast %arg1 : i32 to index
    %c3 = arith.constant 3 : index
    %10 = memref.load %arg2[%9, %c3] : memref<8x6xf32, #tpu.memory_space<smem>>
    %c0_1 = arith.constant 0 : index
    %c0_2 = arith.constant 0 : index
    %c0_3 = arith.constant 0 : index
    %11 = vector.load %arg6[%c0_1, %c0_2, %c0_3] : memref<1x8x1024xf32, #tpu.memory_space<vmem>>, vector<1x8x1024xf32>
    %12 = vector.shape_cast %11 : vector<1x8x1024xf32> to vector<8x1024xf32>
    %c0_4 = arith.constant 0 : index
    %c0_5 = arith.constant 0 : index
    %c0_6 = arith.constant 0 : index
    %13 = vector.load %arg4[%c0_4, %c0_5, %c0_6] : memref<1x8x8xf32, #tpu.memory_space<vmem>>, vector<1x8x8xf32>
    %14 = vector.shape_cast %13 : vector<1x8x8xf32> to vector<8x8xf32>
    %cst = arith.constant dense<0.000000e+00> : vector<8x1024xf32>
    %15 = tpu.matmul %14, %12, %cst {dimension_numbers = #tpu.dot_dimension_numbers<[1], [0], [0], [1], [0, 0, 1, 1], [], []>} : vector<8x8xf32>, vector<8x1024xf32>, vector<8x1024xf32> -> vector<8x1024xf32>
    %16 = vector.broadcast %6 : f32 to vector<8x1024xf32>
    %17 = arith.mulf %16, %12 : vector<8x1024xf32>
    %c0_7 = arith.constant 0 : index
    %c0_8 = arith.constant 0 : index
    %18 = vector.load %arg5[%c0_7, %c0_8] : memref<8x1xf32, #tpu.memory_space<vmem>>, vector<8x1xf32>
    %19 = vector.broadcast %18 : vector<8x1xf32> to vector<8x1024xf32>
    %20 = arith.addf %15, %19 : vector<8x1024xf32>
    %21 = math.tanh %20 : vector<8x1024xf32>
    %22 = vector.broadcast %8 : f32 to vector<8x1024xf32>
    %23 = arith.mulf %22, %21 : vector<8x1024xf32>
    %24 = arith.addf %17, %23 : vector<8x1024xf32>
    %25 = arith.subf %12, %24 : vector<8x1024xf32>
    %26 = vector.broadcast %4 : f32 to vector<8x1024xf32>
    %27 = arith.mulf %25, %26 : vector<8x1024xf32>
    %28 = vector.broadcast %10 : f32 to vector<8x1024xf32>
    %29 = arith.mulf %28, %27 : vector<8x1024xf32>
    %30 = arith.index_cast %arg1 : i32 to index
    %c4 = arith.constant 4 : index
    %31 = memref.load %arg2[%30, %c4] : memref<8x6xf32, #tpu.memory_space<smem>>
    %c0_9 = arith.constant 0 : index
    %c0_10 = arith.constant 0 : index
    %c0_11 = arith.constant 0 : index
    %32 = vector.load %arg7[%c0_9, %c0_10, %c0_11] : memref<2x8x1024xf32, #tpu.memory_space<vmem>>, vector<1x8x1024xf32>
    %33 = vector.shape_cast %32 : vector<1x8x1024xf32> to vector<8x1024xf32>
    %34 = vector.broadcast %31 : f32 to vector<8x1024xf32>
    %35 = arith.mulf %34, %33 : vector<8x1024xf32>
    %36 = arith.addf %29, %35 : vector<8x1024xf32>
    %37 = arith.index_cast %arg1 : i32 to index
    %c5 = arith.constant 5 : index
    %38 = memref.load %arg2[%37, %c5] : memref<8x6xf32, #tpu.memory_space<smem>>
    %c1_12 = arith.constant 1 : index
    %c0_13 = arith.constant 0 : index
    %c0_14 = arith.constant 0 : index
    %39 = vector.load %arg7[%c1_12, %c0_13, %c0_14] : memref<2x8x1024xf32, #tpu.memory_space<vmem>>, vector<1x8x1024xf32>
    %40 = vector.shape_cast %39 : vector<1x8x1024xf32> to vector<8x1024xf32>
    %41 = vector.broadcast %38 : f32 to vector<8x1024xf32>
    %42 = arith.mulf %41, %40 : vector<8x1024xf32>
    %43 = arith.addf %36, %42 : vector<8x1024xf32>
    %44 = arith.addf %12, %43 : vector<8x1024xf32>
    %c0_15 = arith.constant 0 : index
    %c0_16 = arith.constant 0 : index
    %c0_17 = arith.constant 0 : index
    %45 = vector.load %arg6[%c0_15, %c0_16, %c0_17] : memref<1x8x1024xf32, #tpu.memory_space<vmem>>, vector<1x8x1024xf32>
    %46 = vector.shape_cast %45 : vector<1x8x1024xf32> to vector<8x1024xf32>
    %47 = vector.shape_cast %44 : vector<8x1024xf32> to vector<1x8x1024xf32>
    tpu.vector_store %arg6[%c0_15, %c0_16, %c0_17], %47 {strides = array<i32>} : memref<1x8x1024xf32, #tpu.memory_space<vmem>>, vector<1x8x1024xf32>,
    %c2_i32 = arith.constant 2 : i32
    %c0_i32_18 = arith.constant 0 : i32
    %48 = arith.cmpi eq, %c2_i32, %c0_i32_18 : i32
    %c1_i32 = arith.constant 1 : i32
    %49 = arith.select %48, %c1_i32, %c2_i32 : i32
    %50 = arith.remsi %arg1, %49 : i32
    %c0_i32_19 = arith.constant 0 : i32
    %51 = arith.cmpi ne, %50, %c0_i32_19 : i32
    %c0_i32_20 = arith.constant 0 : i32
    %52 = arith.cmpi slt, %50, %c0_i32_20 : i32
    %c0_i32_21 = arith.constant 0 : i32
    %53 = arith.cmpi slt, %49, %c0_i32_21 : i32
    %54 = arith.xori %52, %53 : i1
    %55 = arith.andi %54, %51 : i1
    %56 = arith.addi %50, %49 : i32
    %57 = arith.select %55, %56, %50 : i32
    %c0_i32_22 = arith.constant 0 : i32
    %58 = arith.cmpi eq, %57, %c0_i32_22 : i32
    %59 = arith.extui %58 : i1 to i32
    %c0_i32_23 = arith.constant 0 : i32
    %60 = arith.cmpi ne, %59, %c0_i32_23 : i32
    scf.if %60 {
      %c0_32 = arith.constant 0 : index
      %c0_33 = arith.constant 0 : index
      %c0_34 = arith.constant 0 : index
      %74 = vector.load %arg7[%c0_32, %c0_33, %c0_34] : memref<2x8x1024xf32, #tpu.memory_space<vmem>>, vector<1x8x1024xf32>
      %75 = vector.shape_cast %74 : vector<1x8x1024xf32> to vector<8x1024xf32>
      %76 = vector.shape_cast %27 : vector<8x1024xf32> to vector<1x8x1024xf32>
      tpu.vector_store %arg7[%c0_32, %c0_33, %c0_34], %76 {strides = array<i32>} : memref<2x8x1024xf32, #tpu.memory_space<vmem>>, vector<1x8x1024xf32>,
    } else {
    }
    %c2_i32_24 = arith.constant 2 : i32
    %c0_i32_25 = arith.constant 0 : i32
    %61 = arith.cmpi eq, %c2_i32_24, %c0_i32_25 : i32
    %c1_i32_26 = arith.constant 1 : i32
    %62 = arith.select %61, %c1_i32_26, %c2_i32_24 : i32
    %63 = arith.remsi %arg1, %62 : i32
    %c0_i32_27 = arith.constant 0 : i32
    %64 = arith.cmpi ne, %63, %c0_i32_27 : i32
    %c0_i32_28 = arith.constant 0 : i32
    %65 = arith.cmpi slt, %63, %c0_i32_28 : i32
    %c0_i32_29 = arith.constant 0 : i32
    %66 = arith.cmpi slt, %62, %c0_i32_29 : i32
    %67 = arith.xori %65, %66 : i1
    %68 = arith.andi %67, %64 : i1
    %69 = arith.addi %63, %62 : i32
    %70 = arith.select %68, %69, %63 : i32
    %c1_i32_30 = arith.constant 1 : i32
    %71 = arith.cmpi eq, %70, %c1_i32_30 : i32
    %72 = arith.extui %71 : i1 to i32
    %c0_i32_31 = arith.constant 0 : i32
    %73 = arith.cmpi ne, %72, %c0_i32_31 : i32
    scf.if %73 {
      %c1_32 = arith.constant 1 : index
      %c0_33 = arith.constant 0 : index
      %c0_34 = arith.constant 0 : index
      %74 = vector.load %arg7[%c1_32, %c0_33, %c0_34] : memref<2x8x1024xf32, #tpu.memory_space<vmem>>, vector<1x8x1024xf32>
      %75 = vector.shape_cast %74 : vector<1x8x1024xf32> to vector<8x1024xf32>
      %76 = vector.shape_cast %27 : vector<8x1024xf32> to vector<1x8x1024xf32>
      tpu.vector_store %arg7[%c1_32, %c0_33, %c0_34], %76 {strides = array<i32>} : memref<2x8x1024xf32, #tpu.memory_space<vmem>>, vector<1x8x1024xf32>,
    } else {
    }
    return
  }
  func.func @transform_0(%arg0: i32, %arg1: i32) -> (i32, i32) {
    %c0_i32 = arith.constant 0 : i32
    %c0_i32_0 = arith.constant 0 : i32
    %c0_i32_1 = arith.constant 0 : i32
    return %c0_i32, %c0_i32_0 : i32, i32
  }
  func.func @transform_1(%arg0: i32, %arg1: i32) -> (i32, i32, i32) {
    %c0_i32 = arith.constant 0 : i32
    %c0_i32_0 = arith.constant 0 : i32
    %c0_i32_1 = arith.constant 0 : i32
    return %arg0, %c0_i32, %c0_i32_0 : i32, i32, i32
  }
  func.func @transform_2(%arg0: i32, %arg1: i32) -> (i32, i32, i32) {
    %c0_i32 = arith.constant 0 : i32
    %c0_i32_0 = arith.constant 0 : i32
    %c0_i32_1 = arith.constant 0 : i32
    return %arg1, %c0_i32, %c0_i32_0 : i32, i32, i32
  }
  func.func @transform_3(%arg0: i32, %arg1: i32) -> (i32, i32) {
    %c0_i32 = arith.constant 0 : i32
    %c0_i32_0 = arith.constant 0 : i32
    %c0_i32_1 = arith.constant 0 : i32
    return %c0_i32, %c0_i32_0 : i32, i32
  }
  func.func @transform_4(%arg0: i32, %arg1: i32) -> (i32, i32, i32) {
    %c0_i32 = arith.constant 0 : i32
    %c0_i32_0 = arith.constant 0 : i32
    %c0_i32_1 = arith.constant 0 : i32
    return %arg0, %c0_i32, %c0_i32_0 : i32, i32, i32
  }
}

</mosaic_0001>

<llo_original>
// kernel: lms_run.1
$region0: #{lms_run.1}
  #allocation0 [shape = 'u32[]', space=smem, size = 0x4, offset = 0x4, fixed_abs, tag = 'smem constant byte address 0x4 - core index']
  #allocation1 [shape = 'u32[144,128]{1,0:T(1,128)}', space=vmem, size = 0x12000, scoped, tag = 'internal scratch']
  #allocation2 [shape = 'f32[2,8,1024]{2,1,0:T(8,128)}', space=vmem, size = 0x10000, scoped, tag = 'scratch operand']
  %s0 = inlined_call_operand.vmem [shape: f32[8,6], index: 0, kind: input, shape index: {}]
  %s1 = inlined_call_operand.hbm [shape: f32[2,8,1024], index: 1, kind: input, shape index: {}]
  %s2 = inlined_call_operand.hbm [shape: f32[8,8,8], index: 2, kind: input, shape index: {}]
  %s3 = inlined_call_operand.vmem [shape: f32[8,1], index: 3, kind: input, shape index: {}]
  %s4 = inlined_call_operand.hbm [shape: f32[2,8,1024], index: 4, kind: output, shape index: {}]
  %s5 = sld [smem:[#allocation0]]
  $region73: #{lms_run.1} parent=0
    _
  %s7 = ssub.s32 1, %s5
  %s8 = scalar_select 0, %s7, %s5
  $region1: #{lms_run.1} parent=0
    #allocation3 [shape = 'u8[4096]{0}', space=smem, size = 0x1000, scoped, tag = 'input window, operand 0, single buffered']
    #allocation4 [shape = 's32[2]{0}', space=sflag, size = 0x8, scoped, tag = 'scoped memory for lms_run.1']
    #allocation5 [shape = 's32[2]{0}', space=sflag, size = 0x8, scoped, tag = 'scoped memory for lms_run.1']
    #allocation6 [shape = 's32[2]{0}', space=sflag, size = 0x8, scoped, tag = 'scoped memory for lms_run.1']
    #allocation7 [shape = 'u8[65536]{0}', space=vmem, size = 0x10000, scoped, tag = 'input window, operand 1']
    #allocation8 [shape = 'u8[8192]{0}', space=vmem, size = 0x2000, scoped, tag = 'input window, operand 2']
    #allocation9 [shape = 's32[2]{0}', space=sflag, size = 0x8, scoped, tag = 'scoped memory for lms_run.1']
    #allocation10 [shape = 'u8[65536]{0}', space=vmem, size = 0x10000, scoped, tag = 'output window, operand 0']
    %9 = vsyncpa [#allocation6], 0
    %10 = vsyncpa [#allocation4], 0
    %s11 = scalar_lea.sflag [#allocation4], 1
    %12 = vsyncpa %s11, 0
    %13 = vsyncpa [#allocation9], 0
    %s14 = scalar_lea.sflag [#allocation9], 1
    %15 = vsyncpa %s14, 0
    %16 = vsyncpa [#allocation5], 0
    %s17 = scalar_lea.sflag [#allocation5], 1
    %18 = vsyncpa %s17, 0
    loop: start=0, step=1, limit=18
    $region2: #{lms_run.1} parent=1 // loop_pre_header
      _
    $region3: #{lms_run.1} parent=1 // loop_header
      %s20 = sphi 0, %s24
      %p21 = scmp.ge.s32.totalorder %s20, 18
      %s27 = sphi 0, %s39
      %s28 = sphi 0, %s35
      %s29 = sphi 0, %s27
      %s30 = sphi 0, %s28
      %s31 = sphi 0, %s29
      %s32 = sphi 0, %s30
      %s40 = sphi 0, %s40
      %s42 = sphi 0, %s40
      %s43 = sphi 0, %s42
      %s57 = sphi 0, %s43
      %s63 = sphi 0, %s65
      %s66 = sphi 0, %s63
      %s67 = sphi 0, %s66
      %s83 = sphi 0, %s67
      %s89 = sphi 0, %s91
      %s92 = sphi 0, %s89
      %s93 = sphi 0, %s92
      %s109 = sphi 0, %s93
      %s113 = sphi 0, %s113
      %s115 = sphi 0, %s113
      %s116 = sphi 0, %s115
      %s130 = sphi 0, %s116
      %s136 = sphi 0, %s138
      %s139 = sphi 0, %s136
      %s140 = sphi 0, %s139
      %s156 = sphi 0, %s140
    $region4: #{lms_run.1} parent=1 // loop_header_branch
      %23 = sbr.rel (%p21) target = $region8
    $region5: #{lms_run.1} parent=1 // loop_body
      %s25 = ssub.s32 %s20, 1
      %s26 = ssub.s32 %s20, 2
      %s33 = sadd.s32 1, %s28
      %p34 = scmp.ge.s32.totalorder %s33, 8
      %s35 = scalar_select %p34, 0, %s33
      %s36 = sadd.s32 1, %s27
      %s37 = scalar_select %p34, %s36, %s27
      %p38 = scmp.ge.s32.totalorder %s37, 2
      %s39 = scalar_select %p38, 0, %s37
      %s41 = sadd.s32 %s40, 1
      %p44 = scmp.eq.s32.totalorder %s20, 15
      %p45 = scmp.ne.s32.totalorder %s40, %s42
      %p46 = scmp.eq.s32.totalorder %s20, 0
      %p47 = por %p45, %p46
      %p48 = scmp.ne.s32.totalorder %s40, %s42
      %p49 = scmp.eq.s32.totalorder %s25, 15
      %p50 = por %p48, %p49
      %p51 = scmp.ne.s32.totalorder %s42, %s43
      %p52 = scmp.eq.s32.totalorder %s25, 0
      %p53 = por %p51, %p52
      %p54 = scmp.ne.s32.totalorder %s42, %s43
      %p55 = scmp.eq.s32.totalorder %s26, 15
      %p56 = por %p54, %p55
      %p58 = scmp.ne.s32.totalorder %s43, %s57
      %p59 = scmp.eq.s32.totalorder %s26, 0
      %p60 = por %p58, %p59
      %s61 = ssub.s32 %s27, %s39
      %p62 = scmp.eq.s32.totalorder %s61, 0
      %s64 = sadd.s32 %s63, 1
      %s65 = scalar_select %p62, %s63, %s64
      %p68 = pneg %p62
      %p69 = scmp.eq.s32.totalorder %s20, 15
      %p70 = por %p68, %p69
      %p71 = scmp.ne.s32.totalorder %s63, %s66
      %p72 = scmp.eq.s32.totalorder %s20, 0
      %p73 = por %p71, %p72
      %p74 = scmp.ne.s32.totalorder %s63, %s66
      %p75 = scmp.eq.s32.totalorder %s25, 15
      %p76 = por %p74, %p75
      %p77 = scmp.ne.s32.totalorder %s66, %s67
      %p78 = scmp.eq.s32.totalorder %s25, 0
      %p79 = por %p77, %p78
      %p80 = scmp.ne.s32.totalorder %s66, %s67
      %p81 = scmp.eq.s32.totalorder %s26, 15
      %p82 = por %p80, %p81
      %p84 = scmp.ne.s32.totalorder %s67, %s83
      %p85 = scmp.eq.s32.totalorder %s26, 0
      %p86 = por %p84, %p85
      %s87 = ssub.s32 %s28, %s35
      %p88 = scmp.eq.s32.totalorder %s87, 0
      %s90 = sadd.s32 %s89, 1
      %s91 = scalar_select %p88, %s89, %s90
      %p94 = pneg %p88
      %p95 = scmp.eq.s32.totalorder %s20, 15
      %p96 = por %p94, %p95
      %p97 = scmp.ne.s32.totalorder %s89, %s92
      %p98 = scmp.eq.s32.totalorder %s20, 0
      %p99 = por %p97, %p98
      %p100 = scmp.ne.s32.totalorder %s89, %s92
      %p101 = scmp.eq.s32.totalorder %s25, 15
      %p102 = por %p100, %p101
      %p103 = scmp.ne.s32.totalorder %s92, %s93
      %p104 = scmp.eq.s32.totalorder %s25, 0
      %p105 = por %p103, %p104
      %p106 = scmp.ne.s32.totalorder %s92, %s93
      %p107 = scmp.eq.s32.totalorder %s26, 15
      %p108 = por %p106, %p107
      %p110 = scmp.ne.s32.totalorder %s93, %s109
      %p111 = scmp.eq.s32.totalorder %s26, 0
      %p112 = por %p110, %p111
      %s114 = sadd.s32 %s113, 1
      %p117 = scmp.eq.s32.totalorder %s20, 15
      %p118 = scmp.ne.s32.totalorder %s113, %s115
      %p119 = scmp.eq.s32.totalorder %s20, 0
      %p120 = por %p118, %p119
      %p121 = scmp.ne.s32.totalorder %s113, %s115
      %p122 = scmp.eq.s32.totalorder %s25, 15
      %p123 = por %p121, %p122
      %p124 = scmp.ne.s32.totalorder %s115, %s116
      %p125 = scmp.eq.s32.totalorder %s25, 0
      %p126 = por %p124, %p125
      %p127 = scmp.ne.s32.totalorder %s115, %s116
      %p128 = scmp.eq.s32.totalorder %s26, 15
      %p129 = por %p127, %p128
      %p131 = scmp.ne.s32.totalorder %s116, %s130
      %p132 = scmp.eq.s32.totalorder %s26, 0
      %p133 = por %p131, %p132
      %s134 = ssub.s32 %s27, %s39
      %p135 = scmp.eq.s32.totalorder %s134, 0
      %s137 = sadd.s32 %s136, 1
      %s138 = scalar_select %p135, %s136, %s137
      %p141 = pneg %p135
      %p142 = scmp.eq.s32.totalorder %s20, 15
      %p143 = por %p141, %p142
      %p144 = scmp.ne.s32.totalorder %s136, %s139
      %p145 = scmp.eq.s32.totalorder %s20, 0
      %p146 = por %p144, %p145
      %p147 = scmp.ne.s32.totalorder %s136, %s139
      %p148 = scmp.eq.s32.totalorder %s25, 15
      %p149 = por %p147, %p148
      %p150 = scmp.ne.s32.totalorder %s139, %s140
      %p151 = scmp.eq.s32.totalorder %s25, 0
      %p152 = por %p150, %p151
      %p153 = scmp.ne.s32.totalorder %s139, %s140
      %p154 = scmp.eq.s32.totalorder %s26, 15
      %p155 = por %p153, %p154
      %p157 = scmp.ne.s32.totalorder %s140, %s156
      %p158 = scmp.eq.s32.totalorder %s26, 0
      %p159 = por %p157, %p158
      %p160 = scmp.le.s32.totalorder 1, %s20
      %p161 = scmp.lt.s32.totalorder %s20, 17
      %p162 = pnand %p160, %p161
      %p163 = pneg %p162
      // Predicated region
      $region9: #{lms_run.1} parent=5 // pred_check
        _
      $region10: #{lms_run.1} parent=5 // pred_check_branch
        %165 = sbr.rel (%p162) target = $region12
      $region11: #{lms_run.1} parent=5 // pred_region
        %s166 = ssub.s32 %s20, 1
        // Predicated region
        $region13: #{lms_run.1} parent=11 // pred_check
          %p167 = pneg %p53
        $region14: #{lms_run.1} parent=11 // pred_check_branch
          %169 = sbr.rel (%p167) target = $region16
        $region15: #{lms_run.1} parent=11 // pred_region
          %s171 = ssub.s32 128, 128
          %172 = vsyncadd [#allocation6], %s171
          %s174 = sshll.u32 %s0, 4
          %s175 = int_to_ptr.vmem [resolvable:$true] %s174
          %177 = dma.vmem_to_smem %s175, 128, [#allocation3], [#allocation6]
        $region16: #{lms_run.1} parent=11 // pred_fallthru
          _
        // Predicated region
        $region17: #{lms_run.1} parent=11 // pred_check
          %p178 = pneg %p126
        $region18: #{lms_run.1} parent=11 // pred_check_branch
          %180 = sbr.rel (%p178) target = $region20
        $region19: #{lms_run.1} parent=11 // pred_region
          _
        $region20: #{lms_run.1} parent=11 // pred_fallthru
          _
      $region12: #{lms_run.1} parent=5 // pred_fallthru
        _
      %p181 = scmp.lt.s32.totalorder %s20, 16
      // Predicated region
      $region21: #{lms_run.1} parent=5 // pred_check
        %p182 = pneg %p181
      $region22: #{lms_run.1} parent=5 // pred_check_branch
        %184 = sbr.rel (%p182) target = $region24
      $region23: #{lms_run.1} parent=5 // pred_region
        // Predicated region
        $region25: #{lms_run.1} parent=23 // pred_check
          %p185 = pneg %p73
        $region26: #{lms_run.1} parent=23 // pred_check_branch
          %187 = sbr.rel (%p185) target = $region28
        $region27: #{lms_run.1} parent=23 // pred_region
          %s188 = sand.u32 %s63, 1
          %s189 = scalar_lea.sflag [#allocation4], %s188
          %s190 = sand.u32 %s63, 1
          %s191 = smul.addr %s190, 64
          %s192 = scalar_lea.vmem [#allocation7], %s191
          %s194 = ssub.s32 1024, 1024
          %195 = vsyncadd %s189, %s194
          %s196 = smul.addr %s27, 8
          %s197 = smul.addr %s196, 128
          %s198 = scalar_lea.hbm %s1, %s197
          %s200 = sshll.u32 %s192, 4
          %s201 = int_to_ptr.vmem [resolvable:$true] %s200
          %203 = dma.hbm_to_vmem [thread:$0]  %s198, 1024, %s201, %s189
        $region28: #{lms_run.1} parent=23 // pred_fallthru
          _
        // Predicated region
        $region29: #{lms_run.1} parent=23 // pred_check
          %p204 = pneg %p99
        $region30: #{lms_run.1} parent=23 // pred_check_branch
          %206 = sbr.rel (%p204) target = $region32
        $region31: #{lms_run.1} parent=23 // pred_region
          %s207 = sand.u32 %s89, 1
          %s208 = scalar_lea.sflag [#allocation9], %s207
          %s209 = sand.u32 %s89, 1
          %s210 = smul.addr %s209, 8
          %s211 = scalar_lea.vmem [#allocation8], %s210
          %s213 = ssub.s32 128, 128
          %214 = vsyncadd %s208, %s213
          %s215 = smul.addr %s28, 128
          %s216 = scalar_lea.hbm %s2, %s215
          %s218 = sshll.u32 %s211, 4
          %s219 = int_to_ptr.vmem [resolvable:$true] %s218
          %221 = dma.hbm_to_vmem [thread:$0]  %s216, 128, %s219, %s208
        $region32: #{lms_run.1} parent=23 // pred_fallthru
          _
      $region24: #{lms_run.1} parent=5 // pred_fallthru
        _
      %p222 = scmp.le.s32.totalorder 1, %s20
      %p223 = scmp.lt.s32.totalorder %s20, 17
      %p224 = pnand %p222, %p223
      %p225 = pneg %p224
      // Predicated region
      $region33: #{lms_run.1} parent=5 // pred_check
        _
      $region34: #{lms_run.1} parent=5 // pred_check_branch
        %227 = sbr.rel (%p224) target = $region36
      $region35: #{lms_run.1} parent=5 // pred_region
        %s228 = ssub.s32 %s20, 1
        // Predicated region
        $region37: #{lms_run.1} parent=35 // pred_check
          %p229 = pneg %p53
        $region38: #{lms_run.1} parent=35 // pred_check_branch
          %231 = sbr.rel (%p229) target = $region40
        $region39: #{lms_run.1} parent=35 // pred_region
          %232 = dma.done [#allocation6], 128
        $region40: #{lms_run.1} parent=35 // pred_fallthru
          _
        %s233 = sand.u32 %s66, 1
        %s234 = scalar_lea.sflag [#allocation4], %s233
        %s235 = sand.u32 %s66, 1
        %s236 = smul.addr %s235, 64
        %s237 = scalar_lea.vmem [#allocation7], %s236
        // Predicated region
        $region41: #{lms_run.1} parent=35 // pred_check
          %p238 = pneg %p79
        $region42: #{lms_run.1} parent=35 // pred_check_branch
          %240 = sbr.rel (%p238) target = $region44
        $region43: #{lms_run.1} parent=35 // pred_region
          %241 = dma.done %s234, 1024
        $region44: #{lms_run.1} parent=35 // pred_fallthru
          _
        %s242 = sand.u32 %s92, 1
        %s243 = scalar_lea.sflag [#allocation9], %s242
        %s244 = sand.u32 %s92, 1
        %s245 = smul.addr %s244, 8
        %s246 = scalar_lea.vmem [#allocation8], %s245
        // Predicated region
        $region45: #{lms_run.1} parent=35 // pred_check
          %p247 = pneg %p105
        $region46: #{lms_run.1} parent=35 // pred_check_branch
          %249 = sbr.rel (%p247) target = $region48
        $region47: #{lms_run.1} parent=35 // pred_region
          %250 = dma.done %s243, 128
        $region48: #{lms_run.1} parent=35 // pred_fallthru
          _
        %251 = sfence
        %p252 = pneg %p53
        %p253 = pneg %p50
        %s254 = sand.u32 %s66, 1
        %s255 = scalar_lea.sflag [#allocation4], %s254
        %s256 = sand.u32 %s66, 1
        %s257 = smul.addr %s256, 64
        %s258 = scalar_lea.vmem [#allocation7], %s257
        %p259 = pneg %p79
        %p260 = pneg %p76
        %s261 = sand.u32 %s92, 1
        %s262 = scalar_lea.sflag [#allocation9], %s261
        %s263 = sand.u32 %s92, 1
        %s264 = smul.addr %s263, 8
        %s265 = scalar_lea.vmem [#allocation8], %s264
        %p266 = pneg %p105
        %p267 = pneg %p102
        %p268 = pneg %p126
        %p269 = pneg %p123
        %p270 = pneg %p152
        %p271 = pneg %p149
        %s272 = sand.u32 %s139, 1
        %s273 = scalar_lea.sflag [#allocation5], %s272
        %s274 = sand.u32 %s139, 1
        %s275 = smul.addr %s274, 64
        %s276 = scalar_lea.vmem [#allocation10], %s275
        %p277 = scmp.eq.s32.totalorder %s30, 0
        // Predicated region
        $region49: #{lms_run.1} parent=35 // pred_check
          %p278 = pneg %p277
        $region50: #{lms_run.1} parent=35 // pred_check_branch
          %280 = sbr.rel (%p278) target = $region52
        $region51: #{lms_run.1} parent=35 // pred_region
          %v281 = vld [vmem:[%s237] sm:$0xff]
          %v282 = vld [vmem:[%s237 + $0x8] sm:$0xff]
          %v283 = vld [vmem:[%s237 + $0x10] sm:$0xff]
          %v284 = vld [vmem:[%s237 + $0x18] sm:$0xff]
          %v285 = vld [vmem:[%s237 + $0x20] sm:$0xff]
          %v286 = vld [vmem:[%s237 + $0x28] sm:$0xff]
          %v287 = vld [vmem:[%s237 + $0x30] sm:$0xff]
          %v288 = vld [vmem:[%s237 + $0x38] sm:$0xff]
          %289 = vst [vmem:[%s276] sm:$0xff] %v281
          %290 = vst [vmem:[%s276 + $0x8] sm:$0xff] %v282
          %291 = vst [vmem:[%s276 + $0x10] sm:$0xff] %v283
          %292 = vst [vmem:[%s276 + $0x18] sm:$0xff] %v284
          %293 = vst [vmem:[%s276 + $0x20] sm:$0xff] %v285
          %294 = vst [vmem:[%s276 + $0x28] sm:$0xff] %v286
          %295 = vst [vmem:[%s276 + $0x30] sm:$0xff] %v287
          %296 = vst [vmem:[%s276 + $0x38] sm:$0xff] %v288
          %297 = vst [vmem:[#allocation2] sm:$0xff] 0.0
          %298 = vst [vmem:[#allocation2 + $0x8] sm:$0xff] 0.0
          %299 = vst [vmem:[#allocation2 + $0x10] sm:$0xff] 0.0
          %300 = vst [vmem:[#allocation2 + $0x18] sm:$0xff] 0.0
          %301 = vst [vmem:[#allocation2 + $0x20] sm:$0xff] 0.0
          %302 = vst [vmem:[#allocation2 + $0x28] sm:$0xff] 0.0
          %303 = vst [vmem:[#allocation2 + $0x30] sm:$0xff] 0.0
          %304 = vst [vmem:[#allocation2 + $0x38] sm:$0xff] 0.0
          %305 = vst [vmem:[#allocation2 + $0x40] sm:$0xff] 0.0
          %306 = vst [vmem:[#allocation2 + $0x48] sm:$0xff] 0.0
          %307 = vst [vmem:[#allocation2 + $0x50] sm:$0xff] 0.0
          %308 = vst [vmem:[#allocation2 + $0x58] sm:$0xff] 0.0
          %309 = vst [vmem:[#allocation2 + $0x60] sm:$0xff] 0.0
          %310 = vst [vmem:[#allocation2 + $0x68] sm:$0xff] 0.0
          %311 = vst [vmem:[#allocation2 + $0x70] sm:$0xff] 0.0
          %312 = vst [vmem:[#allocation2 + $0x78] sm:$0xff] 0.0
        $region52: #{lms_run.1} parent=35 // pred_fallthru
          _
        %s313 = smul.u32 %s30, 128
        %s314 = sld [smem:[#allocation3 + %s313]]
        %s315 = sadd.s32 %s313, 1
        %s316 = sld [smem:[#allocation3 + %s315]]
        %s317 = sadd.s32 %s313, 2
        %s318 = sld [smem:[#allocation3 + %s317]]
        %s319 = sadd.s32 %s313, 3
        %s320 = sld [smem:[#allocation3 + %s319]]
        %v321 = vld [vmem:[%s276] sm:$0xff]
        %v322 = vld [vmem:[%s276 + $0x8] sm:$0xff]
        %v323 = vld [vmem:[%s276 + $0x10] sm:$0xff]
        %v324 = vld [vmem:[%s276 + $0x18] sm:$0xff]
        %v325 = vld [vmem:[%s276 + $0x20] sm:$0xff]
        %v326 = vld [vmem:[%s276 + $0x28] sm:$0xff]
        %v327 = vld [vmem:[%s276 + $0x30] sm:$0xff]
        %v328 = vld [vmem:[%s276 + $0x38] sm:$0xff]
        %v329 = vld [vmem:[%s246] sm:$0xff]
        %v330 = vstv %s316
        %v331 = vmul.f32 %v330, %v321
        %v332 = vmul.f32 %v330, %v322
        %v333 = vmul.f32 %v330, %v323
        %v334 = vmul.f32 %v330, %v324
        %v335 = vmul.f32 %v330, %v325
        %v336 = vmul.f32 %v330, %v326
        %v337 = vmul.f32 %v330, %v327
        %v338 = vmul.f32 %v330, %v328
        %v339 = vld [vmem:[%s3] sm:$0xff]
        %341 = vset.pattern.permute.xlu0 0
        %342 = vperm.xlu0 %341, %v339
        %v343 = vpop.permute.xlu0 %342
        %vm345 = vcmask 64512
        %v347 = vsel %vm345, %v329, 0
        %349 = vmatprep.subr.mxu0 %v322
        %350 = vmatpush1.msra.mxu0 %v321
        %351 = vmatprep.subr.mxu0 0.0
        %352 = vmatpush1.msra.mxu0 0.0
        %353 = vmatprep.subr.mxu0 0.0
        %354 = vmatpush1.msra.mxu0 0.0
        %355 = vmatprep.subr.mxu0 0.0
        %356 = vmatpush1.msra.mxu0 0.0
        %357 = vmatprep.subr.mxu0 0.0
        %358 = vmatpush1.msra.mxu0 0.0
        %359 = vmatprep.subr.mxu0 0.0
        %360 = vmatpush1.msra.mxu0 0.0
        %361 = vmatprep.subr.mxu0 0.0
        %362 = vmatpush1.msra.mxu0 0.0
        %363 = vmatprep.subr.mxu0 0.0
        %364 = vmatpush1.msra.mxu0 0.0
        %365 = vmatprep.subr.mxu0 0.0
        %366 = vmatpush1.msra.mxu0 0.0
        %367 = vmatprep.subr.mxu0 0.0
        %368 = vmatpush1.msra.mxu0 0.0
        %369 = vmatprep.subr.mxu0 0.0
        %370 = vmatpush1.msra.mxu0 0.0
        %371 = vmatprep.subr.mxu0 0.0
        %372 = vmatpush1.msra.mxu0 0.0
        %373 = vmatprep.subr.mxu0 0.0
        %374 = vmatpush1.msra.mxu0 0.0
        %375 = vmatprep.subr.mxu0 0.0
        %376 = vmatpush1.msra.mxu0 0.0
        %377 = vmatprep.subr.mxu0 0.0
        %378 = vmatpush1.msra.mxu0 0.0
        %379 = vmatprep.subr.mxu0 0.0
        %380 = vmatpush1.msra.mxu0 0.0
        %381 = vmatprep.subr.mxu0 0.0
        %382 = vmatpush1.msra.mxu0 0.0
        %383 = vmatprep.subr.mxu0 0.0
        %384 = vmatpush1.msra.mxu0 0.0
        %385 = vmatprep.subr.mxu0 0.0
        %386 = vmatpush1.msra.mxu0 0.0
        %387 = vmatprep.subr.mxu0 0.0
        %388 = vmatpush1.msra.mxu0 0.0
        %389 = vmatprep.subr.mxu0 0.0
        %390 = vmatpush1.msra.mxu0 0.0
        %391 = vmatprep.subr.mxu0 0.0
        %392 = vmatpush1.msra.mxu0 0.0
        %393 = vmatprep.subr.mxu0 0.0
        %394 = vmatpush1.msra.mxu0 0.0
        %395 = vmatprep.subr.mxu0 0.0
        %396 = vmatpush1.msra.mxu0 0.0
        %397 = vmatprep.subr.mxu0 0.0
        %398 = vmatpush1.msra.mxu0 0.0
        %399 = vmatprep.subr.mxu0 0.0
        %400 = vmatpush1.msra.mxu0 0.0
        %401 = vmatprep.subr.mxu0 0.0
        %402 = vmatpush1.msra.mxu0 0.0
        %403 = vmatprep.subr.mxu0 0.0
        %404 = vmatpush1.msra.mxu0 0.0
        %405 = vmatprep.subr.mxu0 0.0
        %406 = vmatpush1.msra.mxu0 0.0
        %407 = vmatprep.subr.mxu0 0.0
        %408 = vmatpush1.msra.mxu0 0.0
        %409 = vmatprep.subr.mxu0 0.0
        %410 = vmatpush1.msra.mxu0 0.0
        %411 = vmatprep.subr.mxu0 0.0
        %412 = vmatpush1.msra.mxu0 0.0
        %413 = vmatprep.mubr.f32.mxu0 0.0
        %414 = vmatmul.mubr.f32.gmra.mrb[0].mxu0 %v347
        %v415 = vpop.f32.mrb[0].mxu0
        %v416 = vadd.f32 %v343, %v415
        %v417 = vpop.f32.mrb[0].mxu0
        %v418 = vadd.f32 %v343, %v417
        %419 = vdwg.mxu0
        %420 = vmatprep.subr.mxu0 %v324
        %421 = vmatpush1.msra.mxu0 %v323
        %422 = vmatprep.subr.mxu0 0.0
        %423 = vmatpush1.msra.mxu0 0.0
        %424 = vmatprep.subr.mxu0 0.0
        %425 = vmatpush1.msra.mxu0 0.0
        %426 = vmatprep.subr.mxu0 0.0
        %427 = vmatpush1.msra.mxu0 0.0
        %428 = vmatprep.subr.mxu0 0.0
        %429 = vmatpush1.msra.mxu0 0.0
        %430 = vmatprep.subr.mxu0 0.0
        %431 = vmatpush1.msra.mxu0 0.0
        %432 = vmatprep.subr.mxu0 0.0
        %433 = vmatpush1.msra.mxu0 0.0
        %434 = vmatprep.subr.mxu0 0.0
        %435 = vmatpush1.msra.mxu0 0.0
        %436 = vmatprep.subr.mxu0 0.0
        %437 = vmatpush1.msra.mxu0 0.0
        %438 = vmatprep.subr.mxu0 0.0
        %439 = vmatpush1.msra.mxu0 0.0
        %440 = vmatprep.subr.mxu0 0.0
        %441 = vmatpush1.msra.mxu0 0.0
        %442 = vmatprep.subr.mxu0 0.0
        %443 = vmatpush1.msra.mxu0 0.0
        %444 = vmatprep.subr.mxu0 0.0
        %445 = vmatpush1.msra.mxu0 0.0
        %446 = vmatprep.subr.mxu0 0.0
        %447 = vmatpush1.msra.mxu0 0.0
        %448 = vmatprep.subr.mxu0 0.0
        %449 = vmatpush1.msra.mxu0 0.0
        %450 = vmatprep.subr.mxu0 0.0
        %451 = vmatpush1.msra.mxu0 0.0
        %452 = vmatprep.subr.mxu0 0.0
        %453 = vmatpush1.msra.mxu0 0.0
        %454 = vmatprep.subr.mxu0 0.0
        %455 = vmatpush1.msra.mxu0 0.0
        %456 = vmatprep.subr.mxu0 0.0
        %457 = vmatpush1.msra.mxu0 0.0
        %458 = vmatprep.subr.mxu0 0.0
        %459 = vmatpush1.msra.mxu0 0.0
        %460 = vmatprep.subr.mxu0 0.0
        %461 = vmatpush1.msra.mxu0 0.0
        %462 = vmatprep.subr.mxu0 0.0
        %463 = vmatpush1.msra.mxu0 0.0
        %464 = vmatprep.subr.mxu0 0.0
        %465 = vmatpush1.msra.mxu0 0.0
        %466 = vmatprep.subr.mxu0 0.0
        %467 = vmatpush1.msra.mxu0 0.0
        %468 = vmatprep.subr.mxu0 0.0
        %469 = vmatpush1.msra.mxu0 0.0
        %470 = vmatprep.subr.mxu0 0.0
        %471 = vmatpush1.msra.mxu0 0.0
        %472 = vmatprep.subr.mxu0 0.0
        %473 = vmatpush1.msra.mxu0 0.0
        %474 = vmatprep.subr.mxu0 0.0
        %475 = vmatpush1.msra.mxu0 0.0
        %476 = vmatprep.subr.mxu0 0.0
        %477 = vmatpush1.msra.mxu0 0.0
        %478 = vmatprep.subr.mxu0 0.0
        %479 = vmatpush1.msra.mxu0 0.0
        %480 = vmatprep.subr.mxu0 0.0
        %481 = vmatpush1.msra.mxu0 0.0
        %482 = vmatprep.subr.mxu0 0.0
        %483 = vmatpush1.msra.mxu0 0.0
        %484 = vmatprep.mubr.f32.mxu0 0.0
        %485 = vmatmul.mubr.f32.gmra.mrb[0].mxu0 %v347
        %v486 = vpop.f32.mrb[0].mxu0
        %v487 = vadd.f32 %v343, %v486
        %v488 = vpop.f32.mrb[0].mxu0
        %v489 = vadd.f32 %v343, %v488
        %490 = vdwg.mxu0
        %491 = vmatprep.subr.mxu0 %v326
        %492 = vmatpush1.msra.mxu0 %v325
        %493 = vmatprep.subr.mxu0 0.0
        %494 = vmatpush1.msra.mxu0 0.0
        %495 = vmatprep.subr.mxu0 0.0
        %496 = vmatpush1.msra.mxu0 0.0
        %497 = vmatprep.subr.mxu0 0.0
        %498 = vmatpush1.msra.mxu0 0.0
        %499 = vmatprep.subr.mxu0 0.0
        %500 = vmatpush1.msra.mxu0 0.0
        %501 = vmatprep.subr.mxu0 0.0
        %502 = vmatpush1.msra.mxu0 0.0
        %503 = vmatprep.subr.mxu0 0.0
        %504 = vmatpush1.msra.mxu0 0.0
        %505 = vmatprep.subr.mxu0 0.0
        %506 = vmatpush1.msra.mxu0 0.0
        %507 = vmatprep.subr.mxu0 0.0
        %508 = vmatpush1.msra.mxu0 0.0
        %509 = vmatprep.subr.mxu0 0.0
        %510 = vmatpush1.msra.mxu0 0.0
        %511 = vmatprep.subr.mxu0 0.0
        %512 = vmatpush1.msra.mxu0 0.0
        %513 = vmatprep.subr.mxu0 0.0
        %514 = vmatpush1.msra.mxu0 0.0
        %515 = vmatprep.subr.mxu0 0.0
        %516 = vmatpush1.msra.mxu0 0.0
        %517 = vmatprep.subr.mxu0 0.0
        %518 = vmatpush1.msra.mxu0 0.0
        %519 = vmatprep.subr.mxu0 0.0
        %520 = vmatpush1.msra.mxu0 0.0
        %521 = vmatprep.subr.mxu0 0.0
        %522 = vmatpush1.msra.mxu0 0.0
        %523 = vmatprep.subr.mxu0 0.0
        %524 = vmatpush1.msra.mxu0 0.0
        %525 = vmatprep.subr.mxu0 0.0
        %526 = vmatpush1.msra.mxu0 0.0
        %527 = vmatprep.subr.mxu0 0.0
        %528 = vmatpush1.msra.mxu0 0.0
        %529 = vmatprep.subr.mxu0 0.0
        %530 = vmatpush1.msra.mxu0 0.0
        %531 = vmatprep.subr.mxu0 0.0
        %532 = vmatpush1.msra.mxu0 0.0
        %533 = vmatprep.subr.mxu0 0.0
        %534 = vmatpush1.msra.mxu0 0.0
        %535 = vmatprep.subr.mxu0 0.0
        %536 = vmatpush1.msra.mxu0 0.0
        %537 = vmatprep.subr.mxu0 0.0
        %538 = vmatpush1.msra.mxu0 0.0
        %539 = vmatprep.subr.mxu0 0.0
        %540 = vmatpush1.msra.mxu0 0.0
        %541 = vmatprep.subr.mxu0 0.0
        %542 = vmatpush1.msra.mxu0 0.0
        %543 = vmatprep.subr.mxu0 0.0
        %544 = vmatpush1.msra.mxu0 0.0
        %545 = vmatprep.subr.mxu0 0.0
        %546 = vmatpush1.msra.mxu0 0.0
        %547 = vmatprep.subr.mxu0 0.0
        %548 = vmatpush1.msra.mxu0 0.0
        %549 = vmatprep.subr.mxu0 0.0
        %550 = vmatpush1.msra.mxu0 0.0
        %551 = vmatprep.subr.mxu0 0.0
        %552 = vmatpush1.msra.mxu0 0.0
        %553 = vmatprep.subr.mxu0 0.0
        %554 = vmatpush1.msra.mxu0 0.0
        %555 = vmatprep.mubr.f32.mxu0 0.0
        %556 = vmatmul.mubr.f32.gmra.mrb[0].mxu0 %v347
        %v557 = vpop.f32.mrb[0].mxu0
        %v558 = vadd.f32 %v343, %v557
        %v559 = vpop.f32.mrb[0].mxu0
        %v560 = vadd.f32 %v343, %v559
        %561 = vdwg.mxu0
        %562 = vmatprep.subr.mxu0 %v328
        %563 = vmatpush1.msra.mxu0 %v327
        %564 = vmatprep.subr.mxu0 0.0
        %565 = vmatpush1.msra.mxu0 0.0
        %566 = vmatprep.subr.mxu0 0.0
        %567 = vmatpush1.msra.mxu0 0.0
        %568 = vmatprep.subr.mxu0 0.0
        %569 = vmatpush1.msra.mxu0 0.0
        %570 = vmatprep.subr.mxu0 0.0
        %571 = vmatpush1.msra.mxu0 0.0
        %572 = vmatprep.subr.mxu0 0.0
        %573 = vmatpush1.msra.mxu0 0.0
        %574 = vmatprep.subr.mxu0 0.0
        %575 = vmatpush1.msra.mxu0 0.0
        %576 = vmatprep.subr.mxu0 0.0
        %577 = vmatpush1.msra.mxu0 0.0
        %578 = vmatprep.subr.mxu0 0.0
        %579 = vmatpush1.msra.mxu0 0.0
        %580 = vmatprep.subr.mxu0 0.0
        %581 = vmatpush1.msra.mxu0 0.0
        %582 = vmatprep.subr.mxu0 0.0
        %583 = vmatpush1.msra.mxu0 0.0
        %584 = vmatprep.subr.mxu0 0.0
        %585 = vmatpush1.msra.mxu0 0.0
        %586 = vmatprep.subr.mxu0 0.0
        %587 = vmatpush1.msra.mxu0 0.0
        %588 = vmatprep.subr.mxu0 0.0
        %589 = vmatpush1.msra.mxu0 0.0
        %590 = vmatprep.subr.mxu0 0.0
        %591 = vmatpush1.msra.mxu0 0.0
        %592 = vmatprep.subr.mxu0 0.0
        %593 = vmatpush1.msra.mxu0 0.0
        %594 = vmatprep.subr.mxu0 0.0
        %595 = vmatpush1.msra.mxu0 0.0
        %596 = vmatprep.subr.mxu0 0.0
        %597 = vmatpush1.msra.mxu0 0.0
        %598 = vmatprep.subr.mxu0 0.0
        %599 = vmatpush1.msra.mxu0 0.0
        %600 = vmatprep.subr.mxu0 0.0
        %601 = vmatpush1.msra.mxu0 0.0
        %602 = vmatprep.subr.mxu0 0.0
        %603 = vmatpush1.msra.mxu0 0.0
        %604 = vmatprep.subr.mxu0 0.0
        %605 = vmatpush1.msra.mxu0 0.0
        %606 = vmatprep.subr.mxu0 0.0
        %607 = vmatpush1.msra.mxu0 0.0
        %608 = vmatprep.subr.mxu0 0.0
        %609 = vmatpush1.msra.mxu0 0.0
        %610 = vmatprep.subr.mxu0 0.0
        %611 = vmatpush1.msra.mxu0 0.0
        %612 = vmatprep.subr.mxu0 0.0
        %613 = vmatpush1.msra.mxu0 0.0
        %614 = vmatprep.subr.mxu0 0.0
        %615 = vmatpush1.msra.mxu0 0.0
        %616 = vmatprep.subr.mxu0 0.0
        %617 = vmatpush1.msra.mxu0 0.0
        %618 = vmatprep.subr.mxu0 0.0
        %619 = vmatpush1.msra.mxu0 0.0
        %620 = vmatprep.subr.mxu0 0.0
        %621 = vmatpush1.msra.mxu0 0.0
        %622 = vmatprep.subr.mxu0 0.0
        %623 = vmatpush1.msra.mxu0 0.0
        %624 = vmatprep.subr.mxu0 0.0
        %625 = vmatpush1.msra.mxu0 0.0
        %626 = vmatprep.mubr.f32.mxu0 0.0
        %627 = vmatmul.mubr.f32.gmra.mrb[0].mxu0 %v347
        %v628 = vpop.f32.mrb[0].mxu0
        %v629 = vadd.f32 %v343, %v628
        %v630 = vpop.f32.mrb[0].mxu0
        %v631 = vadd.f32 %v343, %v630
        %632 = vdwg.mxu0
        %v633 = vtanh.pop %v416
        %v634 = vtanh.pop %v418
        %v635 = vtanh.pop %v487
        %v636 = vtanh.pop %v489
        %v637 = vtanh.pop %v558
        %v638 = vtanh.pop %v560
        %v639 = vtanh.pop %v629
        %v640 = vtanh.pop %v631
        %v641 = vstv %s318
        %v642 = vmul.f32 %v641, %v633
        %v643 = vmul.f32 %v641, %v634
        %v644 = vmul.f32 %v641, %v635
        %v645 = vmul.f32 %v641, %v636
        %v646 = vmul.f32 %v641, %v637
        %v647 = vmul.f32 %v641, %v638
        %v648 = vmul.f32 %v641, %v639
        %v649 = vmul.f32 %v641, %v640
        %v650 = vadd.f32 %v331, %v642
        %v651 = vadd.f32 %v332, %v643
        %v652 = vadd.f32 %v333, %v644
        %v653 = vadd.f32 %v334, %v645
        %v654 = vadd.f32 %v335, %v646
        %v655 = vadd.f32 %v336, %v647
        %v656 = vadd.f32 %v337, %v648
        %v657 = vadd.f32 %v338, %v649
        %v658 = vsub.f32 %v321, %v650
        %v659 = vsub.f32 %v322, %v651
        %v660 = vsub.f32 %v323, %v652
        %v661 = vsub.f32 %v324, %v653
        %v662 = vsub.f32 %v325, %v654
        %v663 = vsub.f32 %v326, %v655
        %v664 = vsub.f32 %v327, %v656
        %v665 = vsub.f32 %v328, %v657
        %v666 = vstv %s314
        %v667 = vmul.f32 %v658, %v666
        %v668 = vmul.f32 %v659, %v666
        %v669 = vmul.f32 %v660, %v666
        %v670 = vmul.f32 %v661, %v666
        %v671 = vmul.f32 %v662, %v666
        %v672 = vmul.f32 %v663, %v666
        %v673 = vmul.f32 %v664, %v666
        %v674 = vmul.f32 %v665, %v666
        %v675 = vstv %s320
        %v676 = vmul.f32 %v675, %v667
        %v677 = vmul.f32 %v675, %v668
        %v678 = vmul.f32 %v675, %v669
        %v679 = vmul.f32 %v675, %v670
        %v680 = vmul.f32 %v675, %v671
        %v681 = vmul.f32 %v675, %v672
        %v682 = vmul.f32 %v675, %v673
        %v683 = vmul.f32 %v675, %v674
        %s684 = sadd.s32 %s313, 4
        %s685 = sld [smem:[#allocation3 + %s684]]
        %v686 = vld [vmem:[#allocation2] sm:$0xff]
        %v687 = vld [vmem:[#allocation2 + $0x8] sm:$0xff]
        %v688 = vld [vmem:[#allocation2 + $0x10] sm:$0xff]
        %v689 = vld [vmem:[#allocation2 + $0x18] sm:$0xff]
        %v690 = vld [vmem:[#allocation2 + $0x20] sm:$0xff]
        %v691 = vld [vmem:[#allocation2 + $0x28] sm:$0xff]
        %v692 = vld [vmem:[#allocation2 + $0x30] sm:$0xff]
        %v693 = vld [vmem:[#allocation2 + $0x38] sm:$0xff]
        %v694 = vstv %s685
        %v695 = vmul.f32 %v694, %v686
        %v696 = vmul.f32 %v694, %v687
        %v697 = vmul.f32 %v694, %v688
        %v698 = vmul.f32 %v694, %v689
        %v699 = vmul.f32 %v694, %v690
        %v700 = vmul.f32 %v694, %v691
        %v701 = vmul.f32 %v694, %v692
        %v702 = vmul.f32 %v694, %v693
        %v703 = vadd.f32 %v676, %v695
        %v704 = vadd.f32 %v677, %v696
        %v705 = vadd.f32 %v678, %v697
        %v706 = vadd.f32 %v679, %v698
        %v707 = vadd.f32 %v680, %v699
        %v708 = vadd.f32 %v681, %v700
        %v709 = vadd.f32 %v682, %v701
        %v710 = vadd.f32 %v683, %v702
        %s711 = sadd.s32 %s313, 5
        %s712 = sld [smem:[#allocation3 + %s711]]
        %s713 = scalar_lea.vmem [#allocation2], 64
        %v714 = vld [vmem:[%s713] sm:$0xff]
        %v715 = vld [vmem:[%s713 + $0x8] sm:$0xff]
        %v716 = vld [vmem:[%s713 + $0x10] sm:$0xff]
        %v717 = vld [vmem:[%s713 + $0x18] sm:$0xff]
        %v718 = vld [vmem:[%s713 + $0x20] sm:$0xff]
        %v719 = vld [vmem:[%s713 + $0x28] sm:$0xff]
        %v720 = vld [vmem:[%s713 + $0x30] sm:$0xff]
        %v721 = vld [vmem:[%s713 + $0x38] sm:$0xff]
        %v722 = vstv %s712
        %v723 = vmul.f32 %v722, %v714
        %v724 = vmul.f32 %v722, %v715
        %v725 = vmul.f32 %v722, %v716
        %v726 = vmul.f32 %v722, %v717
        %v727 = vmul.f32 %v722, %v718
        %v728 = vmul.f32 %v722, %v719
        %v729 = vmul.f32 %v722, %v720
        %v730 = vmul.f32 %v722, %v721
        %v731 = vadd.f32 %v703, %v723
        %v732 = vadd.f32 %v704, %v724
        %v733 = vadd.f32 %v705, %v725
        %v734 = vadd.f32 %v706, %v726
        %v735 = vadd.f32 %v707, %v727
        %v736 = vadd.f32 %v708, %v728
        %v737 = vadd.f32 %v709, %v729
        %v738 = vadd.f32 %v710, %v730
        %v739 = vadd.f32 %v321, %v731
        %v740 = vadd.f32 %v322, %v732
        %v741 = vadd.f32 %v323, %v733
        %v742 = vadd.f32 %v324, %v734
        %v743 = vadd.f32 %v325, %v735
        %v744 = vadd.f32 %v326, %v736
        %v745 = vadd.f32 %v327, %v737
        %v746 = vadd.f32 %v328, %v738
        %747 = vst [vmem:[%s276] sm:$0xff] %v739
        %748 = vst [vmem:[%s276 + $0x8] sm:$0xff] %v740
        %749 = vst [vmem:[%s276 + $0x10] sm:$0xff] %v741
        %750 = vst [vmem:[%s276 + $0x18] sm:$0xff] %v742
        %751 = vst [vmem:[%s276 + $0x20] sm:$0xff] %v743
        %752 = vst [vmem:[%s276 + $0x28] sm:$0xff] %v744
        %753 = vst [vmem:[%s276 + $0x30] sm:$0xff] %v745
        %754 = vst [vmem:[%s276 + $0x38] sm:$0xff] %v746
        %p755 = scmp.lt.s32.totalorder %s30, 0
        %s756 = ssub.s32 0, %s30
        %s757 = scalar_select %p755, %s756, %s30
        %s758 = sand.u32 %s757, 1
        %s759 = ssub.s32 0, %s758
        %s760 = scalar_select %p755, %s759, %s758
        %p761 = scmp.ne.s32.totalorder %s760, 0
        %p762 = scmp.lt.s32.totalorder %s760, 0
        %p763 = pnand %p762, %p761
        %p764 = pneg %p763
        %s765 = sadd.s32 %s760, 2
        %s766 = scalar_select %p764, %s765, %s760
        %p767 = scmp.eq.s32.totalorder %s766, 0
        // Predicated region
        $region53: #{lms_run.1} parent=35 // pred_check
          %p768 = pneg %p767
        $region54: #{lms_run.1} parent=35 // pred_check_branch
          %770 = sbr.rel (%p768) target = $region56
        $region55: #{lms_run.1} parent=35 // pred_region
          %771 = vst [vmem:[#allocation2] sm:$0xff] %v667
          %772 = vst [vmem:[#allocation2 + $0x8] sm:$0xff] %v668
          %773 = vst [vmem:[#allocation2 + $0x10] sm:$0xff] %v669
          %774 = vst [vmem:[#allocation2 + $0x18] sm:$0xff] %v670
          %775 = vst [vmem:[#allocation2 + $0x20] sm:$0xff] %v671
          %776 = vst [vmem:[#allocation2 + $0x28] sm:$0xff] %v672
          %777 = vst [vmem:[#allocation2 + $0x30] sm:$0xff] %v673
          %778 = vst [vmem:[#allocation2 + $0x38] sm:$0xff] %v674
        $region56: #{lms_run.1} parent=35 // pred_fallthru
          _
        %p779 = scmp.eq.s32.totalorder %s766, 1
        // Predicated region
        $region57: #{lms_run.1} parent=35 // pred_check
          %p780 = pneg %p779
        $region58: #{lms_run.1} parent=35 // pred_check_branch
          %782 = sbr.rel (%p780) target = $region60
        $region59: #{lms_run.1} parent=35 // pred_region
          %783 = vst [vmem:[%s713] sm:$0xff] %v667
          %784 = vst [vmem:[%s713 + $0x8] sm:$0xff] %v668
          %785 = vst [vmem:[%s713 + $0x10] sm:$0xff] %v669
          %786 = vst [vmem:[%s713 + $0x18] sm:$0xff] %v670
          %787 = vst [vmem:[%s713 + $0x20] sm:$0xff] %v671
          %788 = vst [vmem:[%s713 + $0x28] sm:$0xff] %v672
          %789 = vst [vmem:[%s713 + $0x30] sm:$0xff] %v673
          %790 = vst [vmem:[%s713 + $0x38] sm:$0xff] %v674
        $region60: #{lms_run.1} parent=35 // pred_fallthru
          _
        %s791 = sand.u32 %s139, 1
        %s792 = scalar_lea.sflag [#allocation5], %s791
        %s793 = sand.u32 %s139, 1
        %s794 = smul.addr %s793, 64
        %s795 = scalar_lea.vmem [#allocation10], %s794
        // Predicated region
        $region61: #{lms_run.1} parent=35 // pred_check
          %p796 = pneg %p149
        $region62: #{lms_run.1} parent=35 // pred_check_branch
          %798 = sbr.rel (%p796) target = $region64
        $region63: #{lms_run.1} parent=35 // pred_region
          %s800 = ssub.s32 1024, 1024
          %801 = vsyncadd %s792, %s800
          %s802 = smul.addr %s29, 8
          %s803 = smul.addr %s802, 128
          %s804 = scalar_lea.hbm %s4, %s803
          %s806 = sshll.u32 %s795, 4
          %s807 = int_to_ptr.vmem [resolvable:$true] %s806
          %809 = dma.vmem_to_hbm [thread:$0]  %s807, 1024, %s804, %s792
        $region64: #{lms_run.1} parent=35 // pred_fallthru
          _
      $region36: #{lms_run.1} parent=5 // pred_fallthru
        _
      %p810 = scmp.le.s32.totalorder 2, %s20
      // Predicated region
      $region65: #{lms_run.1} parent=5 // pred_check
        %p811 = pneg %p810
      $region66: #{lms_run.1} parent=5 // pred_check_branch
        %813 = sbr.rel (%p811) target = $region68
      $region67: #{lms_run.1} parent=5 // pred_region
        %s814 = ssub.s32 %s20, 2
        // Predicated region
        $region69: #{lms_run.1} parent=67 // pred_check
          %p815 = pneg %p155
        $region70: #{lms_run.1} parent=67 // pred_check_branch
          %817 = sbr.rel (%p815) target = $region72
        $region71: #{lms_run.1} parent=67 // pred_region
          %s818 = sand.u32 %s140, 1
          %s819 = scalar_lea.sflag [#allocation5], %s818
          %s820 = sand.u32 %s140, 1
          %s821 = smul.addr %s820, 64
          %s822 = scalar_lea.vmem [#allocation10], %s821
          %823 = dma.done %s819, 1024
        $region72: #{lms_run.1} parent=67 // pred_fallthru
          _
      $region68: #{lms_run.1} parent=5 // pred_fallthru
        _
    $region6: #{lms_run.1} parent=1 // loop_footer
      %s24 = sadd.s32 1, %s20
    $region7: #{lms_run.1} parent=1 // loop_footer_branch
      %19 = sbr.rel target = $region3
    $region8: #{lms_run.1} parent=1 // loop_exit
      _
    %824 = vsyncpa [#allocation4], 1
    %s825 = scalar_lea.sflag [#allocation4], 1
    %826 = vsyncpa %s825, 1
    %827 = vsyncpa [#allocation9], 1
    %s828 = scalar_lea.sflag [#allocation9], 1
    %829 = vsyncpa %s828, 1
    %830 = vsyncpa [#allocation5], 1
    %s831 = scalar_lea.sflag [#allocation5], 1
    %832 = vsyncpa %s831, 1
    %833 = vsyncpa [#allocation6], 1
    %s834 = scalar_lea.sflag [#allocation6], 1
    %835 = vsyncpa %s834, 1

</llo_original>
